<compile_context>
chip_gen: v5e
topology: v5e:2x2
jax: 0.10.0
libtpu: 0.0.40
codegen_flags: <defaults>
</compile_context>

<pallas_src>
import jax
import jax.numpy as jnp
from jax import lax
from jax.experimental import pallas as pl
from jax.experimental.pallas import tpu as pltpu


NUM_INPUTS = 100
NUM_OUTPUTS = 3
HIDDEN = 50

PAD_HID = 128   # fused hidden dim: 50 critic + 50 actor + 28 zero pad
PAD_OUT = 8     # fused layer-2 output lanes: col 0 = value, cols 1..3 = logits, rest zero


def _round_up(n, m):
    return ((n + m - 1) // m) * m


def _fused_actor_critic_kernel(x_ref, w1_ref, b1_ref, w2_ref, b2_ref,
                               value_ref, probs_ref):
    x = x_ref[...]                                                   # (BT, 100)

    # Fused layer 1 (critic hidden | actor hidden) + ReLU. K = 100, no pad lanes needed.
    h = jnp.dot(x, w1_ref[...], preferred_element_type=jnp.float32) + b1_ref[...]
    h = jnp.maximum(h, 0.0)                                          # (BT, 128)

    # Fused layer 2 (block-diagonal): col 0 = value, cols 1..3 = actor logits.
    y = jnp.dot(h, w2_ref[...], preferred_element_type=jnp.float32) + b2_ref[...]  # (BT, 8)

    # Softmax over the 3 logit lanes only (lane-masked, exact division).
    col = lax.broadcasted_iota(jnp.int32, y.shape, 1)
    is_prob = jnp.logical_and(col >= 1, col < 1 + NUM_OUTPUTS)
    neg_inf = jnp.float32(-jnp.inf)
    m = jnp.max(jnp.where(is_prob, y, neg_inf), axis=1, keepdims=True)
    e = jnp.exp(jnp.where(is_prob, y - m, neg_inf))                  # exp(-inf)=0 off prob lanes
    probs = e / jnp.sum(e, axis=1, keepdims=True)                    # exact: rows sum to 1

    value_ref[...] = y[:, 0:1].astype(value_ref.dtype)
    probs_ref[...] = probs[:, 1:1 + NUM_OUTPUTS].astype(probs_ref.dtype)


def pack_params(params):
    """Repack the 8 per-head tensors into 4 fused tensors (one-time, host side)."""
    (w1c, b1c, w2c, b2c, w1a, b1a, w2a, b2a) = params

    w1 = jnp.zeros((NUM_INPUTS, PAD_HID), jnp.float32)
    w1 = w1.at[:, :HIDDEN].set(w1c)
    w1 = w1.at[:, HIDDEN:2 * HIDDEN].set(w1a)

    b1 = jnp.zeros((1, PAD_HID), jnp.float32)
    b1 = b1.at[:, :HIDDEN].set(b1c)
    b1 = b1.at[:, HIDDEN:2 * HIDDEN].set(b1a)

    w2 = jnp.zeros((PAD_HID, PAD_OUT), jnp.float32)
    w2 = w2.at[:HIDDEN, 0:1].set(w2c)
    w2 = w2.at[HIDDEN:2 * HIDDEN, 1:1 + NUM_OUTPUTS].set(w2a)

    b2 = jnp.zeros((1, PAD_OUT), jnp.float32)
    b2 = b2.at[:, 0:1].set(b2c)
    b2 = b2.at[:, 1:1 + NUM_OUTPUTS].set(b2a)

    return (w1, b1, w2, b2)


def actor_critic_forward(x, packed_params, *, batch_tile=1024, small_cutoff=512):
    """x: (B, NUM_INPUTS) float32. Returns (value (B,1), probs (B,NUM_OUTPUTS))."""
    B = x.shape[0]
    w1, b1, w2, b2 = packed_params
    x = x.astype(jnp.float32)

    out_shapes = (jax.ShapeDtypeStruct((B, 1), jnp.float32),
                  jax.ShapeDtypeStruct((B, NUM_OUTPUTS), jnp.float32))

    cost = pl.CostEstimate(
        flops=2 * B * NUM_INPUTS * PAD_HID + 2 * B * PAD_HID * PAD_OUT,
        transcendentals=B * NUM_OUTPUTS,
        bytes_accessed=4 * (B * NUM_INPUTS + B * (1 + NUM_OUTPUTS)
                            + NUM_INPUTS * PAD_HID + PAD_HID * PAD_OUT
                            + PAD_HID + PAD_OUT),
    )

    vmem_spec = pl.BlockSpec(memory_space=pltpu.MemorySpace.VMEM)

    if B <= small_cutoff:
        # Grid-less path: whole arrays live in VMEM, no pipeline/step overhead, one DMA each.
        value, probs = pl.pallas_call(
            _fused_actor_critic_kernel,
            out_shape=out_shapes,
            in_specs=[vmem_spec] * 5,
            out_specs=(vmem_spec, vmem_spec),
            cost_estimate=cost,
        )(x, w1, b1, w2, b2)
    else:
        # Gridded path: ensure >= 2 batch tiles so v7x's two TensorCores split the batch
        # (ragged last tile handled by Pallas' boundary masking — no batch padding op).
        if pl.cdiv(B, batch_tile) < 2:
            batch_tile = _round_up(pl.cdiv(B, 2), 8)
        num_tiles = pl.cdiv(B, batch_tile)
        value, probs = pl.pallas_call(
            _fused_actor_critic_kernel,
            out_shape=out_shapes,
            grid=(num_tiles,),
            in_specs=[
                pl.BlockSpec((batch_tile, NUM_INPUTS), lambda i: (i, 0)),
                vmem_spec,   # w1: grid-invariant, whole array resident in VMEM
                vmem_spec,   # b1
                vmem_spec,   # w2
                vmem_spec,   # b2
            ],
            out_specs=(
                pl.BlockSpec((batch_tile, 1), lambda i: (i, 0)),
                pl.BlockSpec((batch_tile, NUM_OUTPUTS), lambda i: (i, 0)),
            ),
            compiler_params=pltpu.CompilerParams(
                dimension_semantics=("parallel",)),
            cost_estimate=cost,
        )(x, w1, b1, w2, b2)

    return value, probs


def init_params(key):
    """PyTorch-default-style Linear init (U[-1/sqrt(fan_in), +1/sqrt(fan_in)]).
    Weights are stored transposed vs. PyTorch, i.e. (in_features, out_features)."""
    def linear(k, fan_in, fan_out):
        kw, kb = jax.random.split(k)
        bound = 1.0 / jnp.sqrt(jnp.float32(fan_in))
        w = jax.random.uniform(kw, (fan_in, fan_out), jnp.float32, -bound, bound)
        b = jax.random.uniform(kb, (1, fan_out), jnp.float32, -bound, bound)
        return w, b

    k1, k2, k3, k4 = jax.random.split(key, 4)
    w1c, b1c = linear(k1, NUM_INPUTS, HIDDEN)
    w2c, b2c = linear(k2, HIDDEN, 1)
    w1a, b1a = linear(k3, NUM_INPUTS, HIDDEN)
    w2a, b2a = linear(k4, HIDDEN, NUM_OUTPUTS)
    return (w1c, b1c, w2c, b2c, w1a, b1a, w2a, b2a)


def reference_forward(x, params):
    (w1c, b1c, w2c, b2c, w1a, b1a, w2a, b2a) = params
    hc = jnp.maximum(x @ w1c + b1c, 0.0)
    value = hc @ w2c + b2c
    ha = jnp.maximum(x @ w1a + b1a, 0.0)
    logits = ha @ w2a + b2a
    probs = jax.nn.softmax(logits, axis=1)
    return value, probs


if __name__ == "__main__":
    # High-precision XLA matmuls for the reference so tolerances are meaningful.
    jax.config.update("jax_default_matmul_precision", "highest")

    key = jax.random.PRNGKey(0)
    k_param, k_x = jax.random.split(key)

    params = init_params(k_param)
    packed = pack_params(params)

    # Small batch -> grid-less VMEM path
    B = 4
    x = jax.random.normal(k_x, (B, NUM_INPUTS), jnp.float32)
    value, probs = actor_critic_forward(x, packed)
    value = jax.block_until_ready(value)
    probs = jax.block_until_ready(probs)

    v_ref, p_ref = reference_forward(x, params)
    assert value.shape == (B, 1) and probs.shape == (B, NUM_OUTPUTS)
    assert jnp.allclose(value, v_ref, atol=1e-3, rtol=1e-3)
    assert jnp.allclose(probs, p_ref, atol=1e-3, rtol=1e-3)
    assert jnp.allclose(jnp.sum(probs, axis=1), 1.0, atol=1e-5)

    # Medium batch -> gridded, megacore-parallel path (2 tiles, ragged last tile)
    B2 = 600
    x2 = jax.random.normal(jax.random.PRNGKey(1), (B2, NUM_INPUTS), jnp.float32)
    v2, p2 = actor_critic_forward(x2, packed)
    v2 = jax.block_until_ready(v2)
    p2 = jax.block_until_ready(p2)
    v2_ref, p2_ref = reference_forward(x2, params)
    assert v2.shape == (B2, 1) and p2.shape == (B2, NUM_OUTPUTS)
    assert jnp.allclose(v2, v2_ref, atol=1e-3, rtol=1e-3)
    assert jnp.allclose(p2, p2_ref, atol=1e-3, rtol=1e-3)
    assert jnp.allclose(jnp.sum(p2, axis=1), 1.0, atol=1e-5)

    print("KERNEL_OK")
</pallas_src>

<mosaic_0001>
module attributes {stable_mosaic.version = 11 : i64} {
  func.func @_fused_actor_critic_kernel(%arg0: memref<4x100xf32, #tpu.memory_space<vmem>>, %arg1: memref<100x128xf32, #tpu.memory_space<vmem>>, %arg2: memref<1x128xf32, #tpu.memory_space<vmem>>, %arg3: memref<128x8xf32, #tpu.memory_space<vmem>>, %arg4: memref<1x8xf32, #tpu.memory_space<vmem>>, %arg5: memref<4x1xf32, #tpu.memory_space<vmem>>, %arg6: memref<4x3xf32, #tpu.memory_space<vmem>>) attributes {dimension_semantics = [], scalar_prefetch = 0 : i64, scratch_operands = 0 : i64, tpu.core_type = #tpu.core_type<tc>} {
    %c0 = arith.constant 0 : index
    %c0_0 = arith.constant 0 : index
    %0 = vector.load %arg0[%c0, %c0_0] : memref<4x100xf32, #tpu.memory_space<vmem>>, vector<4x100xf32>
    %c0_1 = arith.constant 0 : index
    %c0_2 = arith.constant 0 : index
    %1 = vector.load %arg1[%c0_1, %c0_2] : memref<100x128xf32, #tpu.memory_space<vmem>>, vector<100x128xf32>
    %cst = arith.constant dense<0.000000e+00> : vector<4x128xf32>
    %2 = tpu.matmul %0, %1, %cst {dimension_numbers = #tpu.dot_dimension_numbers<[1], [0], [0], [1], [0, 0, 1, 1], [], []>, precision = #tpu.contract_precision<fp32>} : vector<4x100xf32>, vector<100x128xf32>, vector<4x128xf32> -> vector<4x128xf32>
    %c0_3 = arith.constant 0 : index
    %c0_4 = arith.constant 0 : index
    %3 = vector.load %arg2[%c0_3, %c0_4] : memref<1x128xf32, #tpu.memory_space<vmem>>, vector<1x128xf32>
    %4 = vector.broadcast %3 : vector<1x128xf32> to vector<4x128xf32>
    %5 = arith.addf %2, %4 : vector<4x128xf32>
    %cst_5 = arith.constant 0.000000e+00 : f32
    %6 = vector.broadcast %cst_5 : f32 to vector<4x128xf32>
    %7 = arith.maximumf %5, %6 : vector<4x128xf32>
    %c0_6 = arith.constant 0 : index
    %c0_7 = arith.constant 0 : index
    %8 = vector.load %arg3[%c0_6, %c0_7] : memref<128x8xf32, #tpu.memory_space<vmem>>, vector<128x8xf32>
    %cst_8 = arith.constant dense<0.000000e+00> : vector<4x8xf32>
    %9 = tpu.matmul %7, %8, %cst_8 {dimension_numbers = #tpu.dot_dimension_numbers<[1], [0], [0], [1], [0, 0, 1, 1], [], []>, precision = #tpu.contract_precision<fp32>} : vector<4x128xf32>, vector<128x8xf32>, vector<4x8xf32> -> vector<4x8xf32>
    %c0_9 = arith.constant 0 : index
    %c0_10 = arith.constant 0 : index
    %10 = vector.load %arg4[%c0_9, %c0_10] : memref<1x8xf32, #tpu.memory_space<vmem>>, vector<1x8xf32>
    %11 = vector.broadcast %10 : vector<1x8xf32> to vector<4x8xf32>
    %12 = arith.addf %9, %11 : vector<4x8xf32>
    %13 = tpu.iota {dimensions = array<i32: 1>} : vector<4x8xi32>
    %c1_i32 = arith.constant 1 : i32
    %14 = vector.broadcast %c1_i32 : i32 to vector<4x8xi32>
    %15 = arith.cmpi sge, %13, %14 : vector<4x8xi32>
    %c4_i32 = arith.constant 4 : i32
    %16 = vector.broadcast %c4_i32 : i32 to vector<4x8xi32>
    %17 = arith.cmpi slt, %13, %16 : vector<4x8xi32>
    %18 = arith.andi %15, %17 : vector<4x8xi1>
    %cst_11 = arith.constant 0xFF800000 : f32
    %19 = vector.broadcast %cst_11 : f32 to vector<4x8xf32>
    %20 = arith.select %18, %12, %19 : vector<4x8xi1>, vector<4x8xf32>
    %cst_12 = arith.constant dense<0xFF800000> : vector<4xf32>
    %21 = vector.multi_reduction <maximumf>, %20, %cst_12 [1] : vector<4x8xf32> to vector<4xf32>
    %22 = vector.shape_cast %21 : vector<4xf32> to vector<4x1xf32>
    %23 = vector.broadcast %22 : vector<4x1xf32> to vector<4x8xf32>
    %24 = arith.subf %12, %23 : vector<4x8xf32>
    %cst_13 = arith.constant 0xFF800000 : f32
    %25 = vector.broadcast %cst_13 : f32 to vector<4x8xf32>
    %26 = arith.select %18, %24, %25 : vector<4x8xi1>, vector<4x8xf32>
    %27 = math.exp %26 : vector<4x8xf32>
    %cst_14 = arith.constant dense<0.000000e+00> : vector<4xf32>
    %28 = vector.multi_reduction <add>, %27, %cst_14 [1] : vector<4x8xf32> to vector<4xf32>
    %29 = vector.shape_cast %28 : vector<4xf32> to vector<4x1xf32>
    %30 = vector.broadcast %29 : vector<4x1xf32> to vector<4x8xf32>
    %31 = arith.divf %27, %30 : vector<4x8xf32>
    %32 = vector.extract_strided_slice %12 {offsets = [0, 0], sizes = [4, 1], strides = [1, 1]} : vector<4x8xf32> to vector<4x1xf32>
    %c0_15 = arith.constant 0 : index
    %c0_16 = arith.constant 0 : index
    %33 = vector.load %arg5[%c0_15, %c0_16] : memref<4x1xf32, #tpu.memory_space<vmem>>, vector<4x1xf32>
    tpu.vector_store %arg5[%c0_15, %c0_16], %32 {strides = array<i32>} : memref<4x1xf32, #tpu.memory_space<vmem>>, vector<4x1xf32>,
    %34 = vector.extract_strided_slice %31 {offsets = [0, 1], sizes = [4, 3], strides = [1, 1]} : vector<4x8xf32> to vector<4x3xf32>
    %c0_17 = arith.constant 0 : index
    %c0_18 = arith.constant 0 : index
    %35 = vector.load %arg6[%c0_17, %c0_18] : memref<4x3xf32, #tpu.memory_space<vmem>>, vector<4x3xf32>
    tpu.vector_store %arg6[%c0_17, %c0_18], %34 {strides = array<i32>} : memref<4x3xf32, #tpu.memory_space<vmem>>, vector<4x3xf32>,
    return
  }
}

</mosaic_0001>

<llo_original>
// kernel: tpu_custom_call.1
$region0: #{tpu_custom_call.1}
  #allocation0 [shape = 'u32[]', space=smem, size = 0x4, offset = 0x4, fixed_abs, tag = 'smem constant byte address 0x4 - core index']
  #allocation1 [shape = 'u32[72,128]{1,0:T(1,128)}', space=vmem, size = 0x9000, scoped, tag = 'internal scratch']
  %s0 = inlined_call_operand.vmem [shape: f32[4,100], index: 0, kind: input, shape index: {}]
  %s1 = inlined_call_operand.vmem [shape: f32[100,128], index: 1, kind: input, shape index: {}]
  %s2 = inlined_call_operand.vmem [shape: f32[1,128], index: 2, kind: input, shape index: {}]
  %s3 = inlined_call_operand.vmem [shape: f32[128,8], index: 3, kind: input, shape index: {}]
  %s4 = inlined_call_operand.vmem [shape: f32[1,8], index: 4, kind: input, shape index: {}]
  %s5 = inlined_call_operand.vmem [shape: f32[4,1], index: 5, kind: output, shape index: {0}]
  %s6 = inlined_call_operand.hbm [shape: f32[4,3], index: 6, kind: output, shape index: {1}]
  %7 = xla_tuple %s5, %s6
  %s8 = sld [smem:[#allocation0]]
  $region38: #{tpu_custom_call.1} parent=0
    _
  %s10 = ssub.s32 1, %s8
  %s11 = scalar_select 0, %s10, %s8
  $region1: #{tpu_custom_call.1} parent=0
    #allocation2 [shape = 'u8[2048]{0}', space=vmem, size = 0x800, scoped, tag = 'output window, operand 1, single buffered']
    #allocation3 [shape = 's32[1]{0}', space=sflag, size = 0x4, scoped, tag = 'scoped memory for tpu_custom_call.1']
    %12 = vsyncpa [#allocation3], 0
    // Predicated region
    $region2: #{tpu_custom_call.1} parent=1 // pred_check
      _
    $region3: #{tpu_custom_call.1} parent=1 // pred_check_branch
      %14 = sbr.rel (0) target = $region5
    $region4: #{tpu_custom_call.1} parent=1 // pred_region
      _
    $region5: #{tpu_custom_call.1} parent=1 // pred_fallthru
      _
    // Predicated region
    $region6: #{tpu_custom_call.1} parent=1 // pred_check
      _
    $region7: #{tpu_custom_call.1} parent=1 // pred_check_branch
      %16 = sbr.rel (0) target = $region9
    $region8: #{tpu_custom_call.1} parent=1 // pred_region
      _
    $region9: #{tpu_custom_call.1} parent=1 // pred_fallthru
      _
    // Predicated region
    $region10: #{tpu_custom_call.1} parent=1 // pred_check
      _
    $region11: #{tpu_custom_call.1} parent=1 // pred_check_branch
      %18 = sbr.rel (0) target = $region13
    $region12: #{tpu_custom_call.1} parent=1 // pred_region
      _
    $region13: #{tpu_custom_call.1} parent=1 // pred_fallthru
      _
    // Predicated region
    $region14: #{tpu_custom_call.1} parent=1 // pred_check
      _
    $region15: #{tpu_custom_call.1} parent=1 // pred_check_branch
      %20 = sbr.rel (0) target = $region17
    $region16: #{tpu_custom_call.1} parent=1 // pred_region
      _
    $region17: #{tpu_custom_call.1} parent=1 // pred_fallthru
      _
    // Predicated region
    $region18: #{tpu_custom_call.1} parent=1 // pred_check
      _
    $region19: #{tpu_custom_call.1} parent=1 // pred_check_branch
      %22 = sbr.rel (0) target = $region21
    $region20: #{tpu_custom_call.1} parent=1 // pred_region
      _
    $region21: #{tpu_custom_call.1} parent=1 // pred_fallthru
      _
    %v23 = vld [vmem:[%s0] sm:$0xf]
    %v24 = vld [vmem:[%s1] sm:$0xff]
    %v25 = vld [vmem:[%s1 + $0x8] sm:$0xff]
    %v26 = vld [vmem:[%s1 + $0x10] sm:$0xff]
    %v27 = vld [vmem:[%s1 + $0x18] sm:$0xff]
    %v28 = vld [vmem:[%s1 + $0x20] sm:$0xff]
    %v29 = vld [vmem:[%s1 + $0x28] sm:$0xff]
    %v30 = vld [vmem:[%s1 + $0x30] sm:$0xff]
    %v31 = vld [vmem:[%s1 + $0x38] sm:$0xff]
    %v32 = vld [vmem:[%s1 + $0x40] sm:$0xff]
    %v33 = vld [vmem:[%s1 + $0x48] sm:$0xff]
    %v34 = vld [vmem:[%s1 + $0x50] sm:$0xff]
    %v35 = vld [vmem:[%s1 + $0x58] sm:$0xff]
    %v36 = vld [vmem:[%s1 + $0x60] sm:$0xf]
    %v37 = vld [vmem:[%s2] sm:$0x1]
    %v39 = vperm.slane %v37, 0
    %vm41 = vcmask 818176
    %v43 = vsel %vm41, %v23, 0
    %vm45 = vcmask 1043456
    %v47 = vsel %vm45, %v36, 0
    %49 = vmatpush.msra.mxu0 0.0
    %50 = vmatpush.msra.mxu0 0.0
    %51 = vmatpush.msra.mxu0 0.0
    %v52 = vand.u32 %v47, 4294901760
    %53 = vmatpush.msra.mxu0 %v52
    %v54 = vand.u32 %v35, 4294901760
    %55 = vmatpush.msra.mxu0 %v54
    %v56 = vand.u32 %v34, 4294901760
    %57 = vmatpush.msra.mxu0 %v56
    %v58 = vand.u32 %v33, 4294901760
    %59 = vmatpush.msra.mxu0 %v58
    %v60 = vand.u32 %v32, 4294901760
    %61 = vmatpush.msra.mxu0 %v60
    %v62 = vand.u32 %v31, 4294901760
    %63 = vmatpush.msra.mxu0 %v62
    %v64 = vand.u32 %v30, 4294901760
    %65 = vmatpush.msra.mxu0 %v64
    %v66 = vand.u32 %v29, 4294901760
    %67 = vmatpush.msra.mxu0 %v66
    %v68 = vand.u32 %v28, 4294901760
    %69 = vmatpush.msra.mxu0 %v68
    %v70 = vand.u32 %v27, 4294901760
    %71 = vmatpush.msra.mxu0 %v70
    %v72 = vand.u32 %v26, 4294901760
    %73 = vmatpush.msra.mxu0 %v72
    %v74 = vand.u32 %v25, 4294901760
    %75 = vmatpush.msra.mxu0 %v74
    %v76 = vand.u32 %v24, 4294901760
    %77 = vmatpush.msra.mxu0 %v76
    %v78 = vand.u32 %v43, 4294901760
    %v79 = vsub.f32 %v43, %v78
    %v80 = vand.u32 %v79, 4294901760
    %v81 = vsub.f32 %v79, %v80
    %v82 = vand.u32 %v81, 4294901760
    %83 = vmatmul.f32.gmra.mxu0 %v82
    %v84 = vpop.f32.mrf.mxu0
    %v85 = vadd.f32 %v39, %v84
    %86 = vdwg.mxu0
    %87 = vmatpush.msra.mxu0 0.0
    %88 = vmatpush.msra.mxu0 0.0
    %89 = vmatpush.msra.mxu0 0.0
    %v90 = vand.u32 %v47, 4294901760
    %v91 = vsub.f32 %v47, %v90
    %v92 = vand.u32 %v91, 4294901760
    %v93 = vsub.f32 %v91, %v92
    %v94 = vand.u32 %v93, 4294901760
    %95 = vmatpush.msra.mxu0 %v94
    %v96 = vand.u32 %v35, 4294901760
    %v97 = vsub.f32 %v35, %v96
    %v98 = vand.u32 %v97, 4294901760
    %v99 = vsub.f32 %v97, %v98
    %v100 = vand.u32 %v99, 4294901760
    %101 = vmatpush.msra.mxu0 %v100
    %v102 = vand.u32 %v34, 4294901760
    %v103 = vsub.f32 %v34, %v102
    %v104 = vand.u32 %v103, 4294901760
    %v105 = vsub.f32 %v103, %v104
    %v106 = vand.u32 %v105, 4294901760
    %107 = vmatpush.msra.mxu0 %v106
    %v108 = vand.u32 %v33, 4294901760
    %v109 = vsub.f32 %v33, %v108
    %v110 = vand.u32 %v109, 4294901760
    %v111 = vsub.f32 %v109, %v110
    %v112 = vand.u32 %v111, 4294901760
    %113 = vmatpush.msra.mxu0 %v112
    %v114 = vand.u32 %v32, 4294901760
    %v115 = vsub.f32 %v32, %v114
    %v116 = vand.u32 %v115, 4294901760
    %v117 = vsub.f32 %v115, %v116
    %v118 = vand.u32 %v117, 4294901760
    %119 = vmatpush.msra.mxu0 %v118
    %v120 = vand.u32 %v31, 4294901760
    %v121 = vsub.f32 %v31, %v120
    %v122 = vand.u32 %v121, 4294901760
    %v123 = vsub.f32 %v121, %v122
    %v124 = vand.u32 %v123, 4294901760
    %125 = vmatpush.msra.mxu0 %v124
    %v126 = vand.u32 %v30, 4294901760
    %v127 = vsub.f32 %v30, %v126
    %v128 = vand.u32 %v127, 4294901760
    %v129 = vsub.f32 %v127, %v128
    %v130 = vand.u32 %v129, 4294901760
    %131 = vmatpush.msra.mxu0 %v130
    %v132 = vand.u32 %v29, 4294901760
    %v133 = vsub.f32 %v29, %v132
    %v134 = vand.u32 %v133, 4294901760
    %v135 = vsub.f32 %v133, %v134
    %v136 = vand.u32 %v135, 4294901760
    %137 = vmatpush.msra.mxu0 %v136
    %v138 = vand.u32 %v28, 4294901760
    %v139 = vsub.f32 %v28, %v138
    %v140 = vand.u32 %v139, 4294901760
    %v141 = vsub.f32 %v139, %v140
    %v142 = vand.u32 %v141, 4294901760
    %143 = vmatpush.msra.mxu0 %v142
    %v144 = vand.u32 %v27, 4294901760
    %v145 = vsub.f32 %v27, %v144
    %v146 = vand.u32 %v145, 4294901760
    %v147 = vsub.f32 %v145, %v146
    %v148 = vand.u32 %v147, 4294901760
    %149 = vmatpush.msra.mxu0 %v148
    %v150 = vand.u32 %v26, 4294901760
    %v151 = vsub.f32 %v26, %v150
    %v152 = vand.u32 %v151, 4294901760
    %v153 = vsub.f32 %v151, %v152
    %v154 = vand.u32 %v153, 4294901760
    %155 = vmatpush.msra.mxu0 %v154
    %v156 = vand.u32 %v25, 4294901760
    %v157 = vsub.f32 %v25, %v156
    %v158 = vand.u32 %v157, 4294901760
    %v159 = vsub.f32 %v157, %v158
    %v160 = vand.u32 %v159, 4294901760
    %161 = vmatpush.msra.mxu0 %v160
    %v162 = vand.u32 %v24, 4294901760
    %v163 = vsub.f32 %v24, %v162
    %v164 = vand.u32 %v163, 4294901760
    %v165 = vsub.f32 %v163, %v164
    %v166 = vand.u32 %v165, 4294901760
    %167 = vmatpush.msra.mxu0 %v166
    %v168 = vand.u32 %v43, 4294901760
    %169 = vmatmul.f32.gmra.mxu0 %v168
    %v170 = vpop.f32.mrf.mxu0
    %v171 = vadd.f32 %v85, %v170
    %172 = vdwg.mxu0
    %173 = vmatpush.msra.mxu0 0.0
    %174 = vmatpush.msra.mxu0 0.0
    %175 = vmatpush.msra.mxu0 0.0
    %v176 = vand.u32 %v47, 4294901760
    %v177 = vsub.f32 %v47, %v176
    %178 = vmatpush.msra.mxu0 %v177
    %v179 = vand.u32 %v35, 4294901760
    %v180 = vsub.f32 %v35, %v179
    %181 = vmatpush.msra.mxu0 %v180
    %v182 = vand.u32 %v34, 4294901760
    %v183 = vsub.f32 %v34, %v182
    %184 = vmatpush.msra.mxu0 %v183
    %v185 = vand.u32 %v33, 4294901760
    %v186 = vsub.f32 %v33, %v185
    %187 = vmatpush.msra.mxu0 %v186
    %v188 = vand.u32 %v32, 4294901760
    %v189 = vsub.f32 %v32, %v188
    %190 = vmatpush.msra.mxu0 %v189
    %v191 = vand.u32 %v31, 4294901760
    %v192 = vsub.f32 %v31, %v191
    %193 = vmatpush.msra.mxu0 %v192
    %v194 = vand.u32 %v30, 4294901760
    %v195 = vsub.f32 %v30, %v194
    %196 = vmatpush.msra.mxu0 %v195
    %v197 = vand.u32 %v29, 4294901760
    %v198 = vsub.f32 %v29, %v197
    %199 = vmatpush.msra.mxu0 %v198
    %v200 = vand.u32 %v28, 4294901760
    %v201 = vsub.f32 %v28, %v200
    %202 = vmatpush.msra.mxu0 %v201
    %v203 = vand.u32 %v27, 4294901760
    %v204 = vsub.f32 %v27, %v203
    %205 = vmatpush.msra.mxu0 %v204
    %v206 = vand.u32 %v26, 4294901760
    %v207 = vsub.f32 %v26, %v206
    %208 = vmatpush.msra.mxu0 %v207
    %v209 = vand.u32 %v25, 4294901760
    %v210 = vsub.f32 %v25, %v209
    %211 = vmatpush.msra.mxu0 %v210
    %v212 = vand.u32 %v24, 4294901760
    %v213 = vsub.f32 %v24, %v212
    %214 = vmatpush.msra.mxu0 %v213
    %v215 = vand.u32 %v43, 4294901760
    %v216 = vsub.f32 %v43, %v215
    %217 = vmatmul.f32.gmra.mxu0 %v216
    %v218 = vpop.f32.mrf.mxu0
    %v219 = vadd.f32 %v171, %v218
    %220 = vdwg.mxu0
    %221 = vmatpush.msra.mxu0 0.0
    %222 = vmatpush.msra.mxu0 0.0
    %223 = vmatpush.msra.mxu0 0.0
    %v224 = vand.u32 %v47, 4294901760
    %225 = vmatpush.msra.mxu0 %v224
    %v226 = vand.u32 %v35, 4294901760
    %227 = vmatpush.msra.mxu0 %v226
    %v228 = vand.u32 %v34, 4294901760
    %229 = vmatpush.msra.mxu0 %v228
    %v230 = vand.u32 %v33, 4294901760
    %231 = vmatpush.msra.mxu0 %v230
    %v232 = vand.u32 %v32, 4294901760
    %233 = vmatpush.msra.mxu0 %v232
    %v234 = vand.u32 %v31, 4294901760
    %235 = vmatpush.msra.mxu0 %v234
    %v236 = vand.u32 %v30, 4294901760
    %237 = vmatpush.msra.mxu0 %v236
    %v238 = vand.u32 %v29, 4294901760
    %239 = vmatpush.msra.mxu0 %v238
    %v240 = vand.u32 %v28, 4294901760
    %241 = vmatpush.msra.mxu0 %v240
    %v242 = vand.u32 %v27, 4294901760
    %243 = vmatpush.msra.mxu0 %v242
    %v244 = vand.u32 %v26, 4294901760
    %245 = vmatpush.msra.mxu0 %v244
    %v246 = vand.u32 %v25, 4294901760
    %247 = vmatpush.msra.mxu0 %v246
    %v248 = vand.u32 %v24, 4294901760
    %249 = vmatpush.msra.mxu0 %v248
    %v250 = vand.u32 %v43, 4294901760
    %v251 = vsub.f32 %v43, %v250
    %v252 = vand.u32 %v251, 4294901760
    %253 = vmatmul.f32.gmra.mxu0 %v252
    %v254 = vpop.f32.mrf.mxu0
    %v255 = vadd.f32 %v219, %v254
    %256 = vdwg.mxu0
    %257 = vmatpush.msra.mxu0 0.0
    %258 = vmatpush.msra.mxu0 0.0
    %259 = vmatpush.msra.mxu0 0.0
    %v260 = vand.u32 %v47, 4294901760
    %v261 = vsub.f32 %v47, %v260
    %v262 = vand.u32 %v261, 4294901760
    %263 = vmatpush.msra.mxu0 %v262
    %v264 = vand.u32 %v35, 4294901760
    %v265 = vsub.f32 %v35, %v264
    %v266 = vand.u32 %v265, 4294901760
    %267 = vmatpush.msra.mxu0 %v266
    %v268 = vand.u32 %v34, 4294901760
    %v269 = vsub.f32 %v34, %v268
    %v270 = vand.u32 %v269, 4294901760
    %271 = vmatpush.msra.mxu0 %v270
    %v272 = vand.u32 %v33, 4294901760
    %v273 = vsub.f32 %v33, %v272
    %v274 = vand.u32 %v273, 4294901760
    %275 = vmatpush.msra.mxu0 %v274
    %v276 = vand.u32 %v32, 4294901760
    %v277 = vsub.f32 %v32, %v276
    %v278 = vand.u32 %v277, 4294901760
    %279 = vmatpush.msra.mxu0 %v278
    %v280 = vand.u32 %v31, 4294901760
    %v281 = vsub.f32 %v31, %v280
    %v282 = vand.u32 %v281, 4294901760
    %283 = vmatpush.msra.mxu0 %v282
    %v284 = vand.u32 %v30, 4294901760
    %v285 = vsub.f32 %v30, %v284
    %v286 = vand.u32 %v285, 4294901760
    %287 = vmatpush.msra.mxu0 %v286
    %v288 = vand.u32 %v29, 4294901760
    %v289 = vsub.f32 %v29, %v288
    %v290 = vand.u32 %v289, 4294901760
    %291 = vmatpush.msra.mxu0 %v290
    %v292 = vand.u32 %v28, 4294901760
    %v293 = vsub.f32 %v28, %v292
    %v294 = vand.u32 %v293, 4294901760
    %295 = vmatpush.msra.mxu0 %v294
    %v296 = vand.u32 %v27, 4294901760
    %v297 = vsub.f32 %v27, %v296
    %v298 = vand.u32 %v297, 4294901760
    %299 = vmatpush.msra.mxu0 %v298
    %v300 = vand.u32 %v26, 4294901760
    %v301 = vsub.f32 %v26, %v300
    %v302 = vand.u32 %v301, 4294901760
    %303 = vmatpush.msra.mxu0 %v302
    %v304 = vand.u32 %v25, 4294901760
    %v305 = vsub.f32 %v25, %v304
    %v306 = vand.u32 %v305, 4294901760
    %307 = vmatpush.msra.mxu0 %v306
    %v308 = vand.u32 %v24, 4294901760
    %v309 = vsub.f32 %v24, %v308
    %v310 = vand.u32 %v309, 4294901760
    %311 = vmatpush.msra.mxu0 %v310
    %v312 = vand.u32 %v43, 4294901760
    %313 = vmatmul.f32.gmra.mxu0 %v312
    %v314 = vpop.f32.mrf.mxu0
    %v315 = vadd.f32 %v255, %v314
    %316 = vdwg.mxu0
    %317 = vmatpush.msra.mxu0 0.0
    %318 = vmatpush.msra.mxu0 0.0
    %319 = vmatpush.msra.mxu0 0.0
    %v320 = vand.u32 %v47, 4294901760
    %321 = vmatpush.msra.mxu0 %v320
    %v322 = vand.u32 %v35, 4294901760
    %323 = vmatpush.msra.mxu0 %v322
    %v324 = vand.u32 %v34, 4294901760
    %325 = vmatpush.msra.mxu0 %v324
    %v326 = vand.u32 %v33, 4294901760
    %327 = vmatpush.msra.mxu0 %v326
    %v328 = vand.u32 %v32, 4294901760
    %329 = vmatpush.msra.mxu0 %v328
    %v330 = vand.u32 %v31, 4294901760
    %331 = vmatpush.msra.mxu0 %v330
    %v332 = vand.u32 %v30, 4294901760
    %333 = vmatpush.msra.mxu0 %v332
    %v334 = vand.u32 %v29, 4294901760
    %335 = vmatpush.msra.mxu0 %v334
    %v336 = vand.u32 %v28, 4294901760
    %337 = vmatpush.msra.mxu0 %v336
    %v338 = vand.u32 %v27, 4294901760
    %339 = vmatpush.msra.mxu0 %v338
    %v340 = vand.u32 %v26, 4294901760
    %341 = vmatpush.msra.mxu0 %v340
    %v342 = vand.u32 %v25, 4294901760
    %343 = vmatpush.msra.mxu0 %v342
    %v344 = vand.u32 %v24, 4294901760
    %345 = vmatpush.msra.mxu0 %v344
    %v346 = vand.u32 %v43, 4294901760
    %347 = vmatmul.f32.gmra.mxu0 %v346
    %v348 = vpop.f32.mrf.mxu0
    %v349 = vadd.f32 %v315, %v348
    %350 = vdwg.mxu0
    %v351 = vmax.f32 %v349, 0.0
    %v352 = vld [vmem:[%s3] sm:$0xff]
    %v353 = vld [vmem:[%s3 + $0x8] sm:$0xff]
    %v354 = vld [vmem:[%s3 + $0x10] sm:$0xff]
    %v355 = vld [vmem:[%s3 + $0x18] sm:$0xff]
    %v356 = vld [vmem:[%s3 + $0x20] sm:$0xff]
    %v357 = vld [vmem:[%s3 + $0x28] sm:$0xff]
    %v358 = vld [vmem:[%s3 + $0x30] sm:$0xff]
    %v359 = vld [vmem:[%s3 + $0x38] sm:$0xff]
    %v360 = vld [vmem:[%s3 + $0x40] sm:$0xff]
    %v361 = vld [vmem:[%s3 + $0x48] sm:$0xff]
    %v362 = vld [vmem:[%s3 + $0x50] sm:$0xff]
    %v363 = vld [vmem:[%s3 + $0x58] sm:$0xff]
    %v364 = vld [vmem:[%s3 + $0x60] sm:$0xff]
    %v365 = vld [vmem:[%s3 + $0x68] sm:$0xff]
    %v366 = vld [vmem:[%s3 + $0x70] sm:$0xff]
    %v367 = vld [vmem:[%s3 + $0x78] sm:$0xff]
    %v368 = vld [vmem:[%s4] sm:$0x1]
    %v370 = vperm.slane %v368, 0
    %v372 = vand.u32 %v367, 4294901760
    %373 = vmatpush.msra.mxu0 %v372
    %v374 = vand.u32 %v366, 4294901760
    %375 = vmatpush.msra.mxu0 %v374
    %v376 = vand.u32 %v365, 4294901760
    %377 = vmatpush.msra.mxu0 %v376
    %v378 = vand.u32 %v364, 4294901760
    %379 = vmatpush.msra.mxu0 %v378
    %v380 = vand.u32 %v363, 4294901760
    %381 = vmatpush.msra.mxu0 %v380
    %v382 = vand.u32 %v362, 4294901760
    %383 = vmatpush.msra.mxu0 %v382
    %v384 = vand.u32 %v361, 4294901760
    %385 = vmatpush.msra.mxu0 %v384
    %v386 = vand.u32 %v360, 4294901760
    %387 = vmatpush.msra.mxu0 %v386
    %v388 = vand.u32 %v359, 4294901760
    %389 = vmatpush.msra.mxu0 %v388
    %v390 = vand.u32 %v358, 4294901760
    %391 = vmatpush.msra.mxu0 %v390
    %v392 = vand.u32 %v357, 4294901760
    %393 = vmatpush.msra.mxu0 %v392
    %v394 = vand.u32 %v356, 4294901760
    %395 = vmatpush.msra.mxu0 %v394
    %v396 = vand.u32 %v355, 4294901760
    %397 = vmatpush.msra.mxu0 %v396
    %v398 = vand.u32 %v354, 4294901760
    %399 = vmatpush.msra.mxu0 %v398
    %v400 = vand.u32 %v353, 4294901760
    %401 = vmatpush.msra.mxu0 %v400
    %v402 = vand.u32 %v352, 4294901760
    %403 = vmatpush.msra.mxu0 %v402
    %v404 = vand.u32 %v351, 4294901760
    %v405 = vsub.f32 %v351, %v404
    %v406 = vand.u32 %v405, 4294901760
    %v407 = vsub.f32 %v405, %v406
    %v408 = vand.u32 %v407, 4294901760
    %409 = vmatmul.f32.gmra.mxu0 %v408
    %v410 = vpop.f32.mrf.mxu0
    %v411 = vadd.f32 %v370, %v410
    %412 = vdwg.mxu0
    %v413 = vand.u32 %v367, 4294901760
    %v414 = vsub.f32 %v367, %v413
    %v415 = vand.u32 %v414, 4294901760
    %v416 = vsub.f32 %v414, %v415
    %v417 = vand.u32 %v416, 4294901760
    %418 = vmatpush.msra.mxu0 %v417
    %v419 = vand.u32 %v366, 4294901760
    %v420 = vsub.f32 %v366, %v419
    %v421 = vand.u32 %v420, 4294901760
    %v422 = vsub.f32 %v420, %v421
    %v423 = vand.u32 %v422, 4294901760
    %424 = vmatpush.msra.mxu0 %v423
    %v425 = vand.u32 %v365, 4294901760
    %v426 = vsub.f32 %v365, %v425
    %v427 = vand.u32 %v426, 4294901760
    %v428 = vsub.f32 %v426, %v427
    %v429 = vand.u32 %v428, 4294901760
    %430 = vmatpush.msra.mxu0 %v429
    %v431 = vand.u32 %v364, 4294901760
    %v432 = vsub.f32 %v364, %v431
    %v433 = vand.u32 %v432, 4294901760
    %v434 = vsub.f32 %v432, %v433
    %v435 = vand.u32 %v434, 4294901760
    %436 = vmatpush.msra.mxu0 %v435
    %v437 = vand.u32 %v363, 4294901760
    %v438 = vsub.f32 %v363, %v437
    %v439 = vand.u32 %v438, 4294901760
    %v440 = vsub.f32 %v438, %v439
    %v441 = vand.u32 %v440, 4294901760
    %442 = vmatpush.msra.mxu0 %v441
    %v443 = vand.u32 %v362, 4294901760
    %v444 = vsub.f32 %v362, %v443
    %v445 = vand.u32 %v444, 4294901760
    %v446 = vsub.f32 %v444, %v445
    %v447 = vand.u32 %v446, 4294901760
    %448 = vmatpush.msra.mxu0 %v447
    %v449 = vand.u32 %v361, 4294901760
    %v450 = vsub.f32 %v361, %v449
    %v451 = vand.u32 %v450, 4294901760
    %v452 = vsub.f32 %v450, %v451
    %v453 = vand.u32 %v452, 4294901760
    %454 = vmatpush.msra.mxu0 %v453
    %v455 = vand.u32 %v360, 4294901760
    %v456 = vsub.f32 %v360, %v455
    %v457 = vand.u32 %v456, 4294901760
    %v458 = vsub.f32 %v456, %v457
    %v459 = vand.u32 %v458, 4294901760
    %460 = vmatpush.msra.mxu0 %v459
    %v461 = vand.u32 %v359, 4294901760
    %v462 = vsub.f32 %v359, %v461
    %v463 = vand.u32 %v462, 4294901760
    %v464 = vsub.f32 %v462, %v463
    %v465 = vand.u32 %v464, 4294901760
    %466 = vmatpush.msra.mxu0 %v465
    %v467 = vand.u32 %v358, 4294901760
    %v468 = vsub.f32 %v358, %v467
    %v469 = vand.u32 %v468, 4294901760
    %v470 = vsub.f32 %v468, %v469
    %v471 = vand.u32 %v470, 4294901760
    %472 = vmatpush.msra.mxu0 %v471
    %v473 = vand.u32 %v357, 4294901760
    %v474 = vsub.f32 %v357, %v473
    %v475 = vand.u32 %v474, 4294901760
    %v476 = vsub.f32 %v474, %v475
    %v477 = vand.u32 %v476, 4294901760
    %478 = vmatpush.msra.mxu0 %v477
    %v479 = vand.u32 %v356, 4294901760
    %v480 = vsub.f32 %v356, %v479
    %v481 = vand.u32 %v480, 4294901760
    %v482 = vsub.f32 %v480, %v481
    %v483 = vand.u32 %v482, 4294901760
    %484 = vmatpush.msra.mxu0 %v483
    %v485 = vand.u32 %v355, 4294901760
    %v486 = vsub.f32 %v355, %v485
    %v487 = vand.u32 %v486, 4294901760
    %v488 = vsub.f32 %v486, %v487
    %v489 = vand.u32 %v488, 4294901760
    %490 = vmatpush.msra.mxu0 %v489
    %v491 = vand.u32 %v354, 4294901760
    %v492 = vsub.f32 %v354, %v491
    %v493 = vand.u32 %v492, 4294901760
    %v494 = vsub.f32 %v492, %v493
    %v495 = vand.u32 %v494, 4294901760
    %496 = vmatpush.msra.mxu0 %v495
    %v497 = vand.u32 %v353, 4294901760
    %v498 = vsub.f32 %v353, %v497
    %v499 = vand.u32 %v498, 4294901760
    %v500 = vsub.f32 %v498, %v499
    %v501 = vand.u32 %v500, 4294901760
    %502 = vmatpush.msra.mxu0 %v501
    %v503 = vand.u32 %v352, 4294901760
    %v504 = vsub.f32 %v352, %v503
    %v505 = vand.u32 %v504, 4294901760
    %v506 = vsub.f32 %v504, %v505
    %v507 = vand.u32 %v506, 4294901760
    %508 = vmatpush.msra.mxu0 %v507
    %v509 = vand.u32 %v351, 4294901760
    %510 = vmatmul.f32.gmra.mxu0 %v509
    %v511 = vpop.f32.mrf.mxu0
    %v512 = vadd.f32 %v411, %v511
    %513 = vdwg.mxu0
    %v514 = vand.u32 %v367, 4294901760
    %v515 = vsub.f32 %v367, %v514
    %516 = vmatpush.msra.mxu0 %v515
    %v517 = vand.u32 %v366, 4294901760
    %v518 = vsub.f32 %v366, %v517
    %519 = vmatpush.msra.mxu0 %v518
    %v520 = vand.u32 %v365, 4294901760
    %v521 = vsub.f32 %v365, %v520
    %522 = vmatpush.msra.mxu0 %v521
    %v523 = vand.u32 %v364, 4294901760
    %v524 = vsub.f32 %v364, %v523
    %525 = vmatpush.msra.mxu0 %v524
    %v526 = vand.u32 %v363, 4294901760
    %v527 = vsub.f32 %v363, %v526
    %528 = vmatpush.msra.mxu0 %v527
    %v529 = vand.u32 %v362, 4294901760
    %v530 = vsub.f32 %v362, %v529
    %531 = vmatpush.msra.mxu0 %v530
    %v532 = vand.u32 %v361, 4294901760
    %v533 = vsub.f32 %v361, %v532
    %534 = vmatpush.msra.mxu0 %v533
    %v535 = vand.u32 %v360, 4294901760
    %v536 = vsub.f32 %v360, %v535
    %537 = vmatpush.msra.mxu0 %v536
    %v538 = vand.u32 %v359, 4294901760
    %v539 = vsub.f32 %v359, %v538
    %540 = vmatpush.msra.mxu0 %v539
    %v541 = vand.u32 %v358, 4294901760
    %v542 = vsub.f32 %v358, %v541
    %543 = vmatpush.msra.mxu0 %v542
    %v544 = vand.u32 %v357, 4294901760
    %v545 = vsub.f32 %v357, %v544
    %546 = vmatpush.msra.mxu0 %v545
    %v547 = vand.u32 %v356, 4294901760
    %v548 = vsub.f32 %v356, %v547
    %549 = vmatpush.msra.mxu0 %v548
    %v550 = vand.u32 %v355, 4294901760
    %v551 = vsub.f32 %v355, %v550
    %552 = vmatpush.msra.mxu0 %v551
    %v553 = vand.u32 %v354, 4294901760
    %v554 = vsub.f32 %v354, %v553
    %555 = vmatpush.msra.mxu0 %v554
    %v556 = vand.u32 %v353, 4294901760
    %v557 = vsub.f32 %v353, %v556
    %558 = vmatpush.msra.mxu0 %v557
    %v559 = vand.u32 %v352, 4294901760
    %v560 = vsub.f32 %v352, %v559
    %561 = vmatpush.msra.mxu0 %v560
    %v562 = vand.u32 %v351, 4294901760
    %v563 = vsub.f32 %v351, %v562
    %564 = vmatmul.f32.gmra.mxu0 %v563
    %v565 = vpop.f32.mrf.mxu0
    %v566 = vadd.f32 %v512, %v565
    %567 = vdwg.mxu0
    %v568 = vand.u32 %v367, 4294901760
    %569 = vmatpush.msra.mxu0 %v568
    %v570 = vand.u32 %v366, 4294901760
    %571 = vmatpush.msra.mxu0 %v570
    %v572 = vand.u32 %v365, 4294901760
    %573 = vmatpush.msra.mxu0 %v572
    %v574 = vand.u32 %v364, 4294901760
    %575 = vmatpush.msra.mxu0 %v574
    %v576 = vand.u32 %v363, 4294901760
    %577 = vmatpush.msra.mxu0 %v576
    %v578 = vand.u32 %v362, 4294901760
    %579 = vmatpush.msra.mxu0 %v578
    %v580 = vand.u32 %v361, 4294901760
    %581 = vmatpush.msra.mxu0 %v580
    %v582 = vand.u32 %v360, 4294901760
    %583 = vmatpush.msra.mxu0 %v582
    %v584 = vand.u32 %v359, 4294901760
    %585 = vmatpush.msra.mxu0 %v584
    %v586 = vand.u32 %v358, 4294901760
    %587 = vmatpush.msra.mxu0 %v586
    %v588 = vand.u32 %v357, 4294901760
    %589 = vmatpush.msra.mxu0 %v588
    %v590 = vand.u32 %v356, 4294901760
    %591 = vmatpush.msra.mxu0 %v590
    %v592 = vand.u32 %v355, 4294901760
    %593 = vmatpush.msra.mxu0 %v592
    %v594 = vand.u32 %v354, 4294901760
    %595 = vmatpush.msra.mxu0 %v594
    %v596 = vand.u32 %v353, 4294901760
    %597 = vmatpush.msra.mxu0 %v596
    %v598 = vand.u32 %v352, 4294901760
    %599 = vmatpush.msra.mxu0 %v598
    %v600 = vand.u32 %v351, 4294901760
    %v601 = vsub.f32 %v351, %v600
    %v602 = vand.u32 %v601, 4294901760
    %603 = vmatmul.f32.gmra.mxu0 %v602
    %v604 = vpop.f32.mrf.mxu0
    %v605 = vadd.f32 %v566, %v604
    %606 = vdwg.mxu0
    %v607 = vand.u32 %v367, 4294901760
    %v608 = vsub.f32 %v367, %v607
    %v609 = vand.u32 %v608, 4294901760
    %610 = vmatpush.msra.mxu0 %v609
    %v611 = vand.u32 %v366, 4294901760
    %v612 = vsub.f32 %v366, %v611
    %v613 = vand.u32 %v612, 4294901760
    %614 = vmatpush.msra.mxu0 %v613
    %v615 = vand.u32 %v365, 4294901760
    %v616 = vsub.f32 %v365, %v615
    %v617 = vand.u32 %v616, 4294901760
    %618 = vmatpush.msra.mxu0 %v617
    %v619 = vand.u32 %v364, 4294901760
    %v620 = vsub.f32 %v364, %v619
    %v621 = vand.u32 %v620, 4294901760
    %622 = vmatpush.msra.mxu0 %v621
    %v623 = vand.u32 %v363, 4294901760
    %v624 = vsub.f32 %v363, %v623
    %v625 = vand.u32 %v624, 4294901760
    %626 = vmatpush.msra.mxu0 %v625
    %v627 = vand.u32 %v362, 4294901760
    %v628 = vsub.f32 %v362, %v627
    %v629 = vand.u32 %v628, 4294901760
    %630 = vmatpush.msra.mxu0 %v629
    %v631 = vand.u32 %v361, 4294901760
    %v632 = vsub.f32 %v361, %v631
    %v633 = vand.u32 %v632, 4294901760
    %634 = vmatpush.msra.mxu0 %v633
    %v635 = vand.u32 %v360, 4294901760
    %v636 = vsub.f32 %v360, %v635
    %v637 = vand.u32 %v636, 4294901760
    %638 = vmatpush.msra.mxu0 %v637
    %v639 = vand.u32 %v359, 4294901760
    %v640 = vsub.f32 %v359, %v639
    %v641 = vand.u32 %v640, 4294901760
    %642 = vmatpush.msra.mxu0 %v641
    %v643 = vand.u32 %v358, 4294901760
    %v644 = vsub.f32 %v358, %v643
    %v645 = vand.u32 %v644, 4294901760
    %646 = vmatpush.msra.mxu0 %v645
    %v647 = vand.u32 %v357, 4294901760
    %v648 = vsub.f32 %v357, %v647
    %v649 = vand.u32 %v648, 4294901760
    %650 = vmatpush.msra.mxu0 %v649
    %v651 = vand.u32 %v356, 4294901760
    %v652 = vsub.f32 %v356, %v651
    %v653 = vand.u32 %v652, 4294901760
    %654 = vmatpush.msra.mxu0 %v653
    %v655 = vand.u32 %v355, 4294901760
    %v656 = vsub.f32 %v355, %v655
    %v657 = vand.u32 %v656, 4294901760
    %658 = vmatpush.msra.mxu0 %v657
    %v659 = vand.u32 %v354, 4294901760
    %v660 = vsub.f32 %v354, %v659
    %v661 = vand.u32 %v660, 4294901760
    %662 = vmatpush.msra.mxu0 %v661
    %v663 = vand.u32 %v353, 4294901760
    %v664 = vsub.f32 %v353, %v663
    %v665 = vand.u32 %v664, 4294901760
    %666 = vmatpush.msra.mxu0 %v665
    %v667 = vand.u32 %v352, 4294901760
    %v668 = vsub.f32 %v352, %v667
    %v669 = vand.u32 %v668, 4294901760
    %670 = vmatpush.msra.mxu0 %v669
    %v671 = vand.u32 %v351, 4294901760
    %672 = vmatmul.f32.gmra.mxu0 %v671
    %v673 = vpop.f32.mrf.mxu0
    %v674 = vadd.f32 %v605, %v673
    %675 = vdwg.mxu0
    %v676 = vand.u32 %v367, 4294901760
    %677 = vmatpush.msra.mxu0 %v676
    %v678 = vand.u32 %v366, 4294901760
    %679 = vmatpush.msra.mxu0 %v678
    %v680 = vand.u32 %v365, 4294901760
    %681 = vmatpush.msra.mxu0 %v680
    %v682 = vand.u32 %v364, 4294901760
    %683 = vmatpush.msra.mxu0 %v682
    %v684 = vand.u32 %v363, 4294901760
    %685 = vmatpush.msra.mxu0 %v684
    %v686 = vand.u32 %v362, 4294901760
    %687 = vmatpush.msra.mxu0 %v686
    %v688 = vand.u32 %v361, 4294901760
    %689 = vmatpush.msra.mxu0 %v688
    %v690 = vand.u32 %v360, 4294901760
    %691 = vmatpush.msra.mxu0 %v690
    %v692 = vand.u32 %v359, 4294901760
    %693 = vmatpush.msra.mxu0 %v692
    %v694 = vand.u32 %v358, 4294901760
    %695 = vmatpush.msra.mxu0 %v694
    %v696 = vand.u32 %v357, 4294901760
    %697 = vmatpush.msra.mxu0 %v696
    %v698 = vand.u32 %v356, 4294901760
    %699 = vmatpush.msra.mxu0 %v698
    %v700 = vand.u32 %v355, 4294901760
    %701 = vmatpush.msra.mxu0 %v700
    %v702 = vand.u32 %v354, 4294901760
    %703 = vmatpush.msra.mxu0 %v702
    %v704 = vand.u32 %v353, 4294901760
    %705 = vmatpush.msra.mxu0 %v704
    %v706 = vand.u32 %v352, 4294901760
    %707 = vmatpush.msra.mxu0 %v706
    %v708 = vand.u32 %v351, 4294901760
    %709 = vmatmul.f32.gmra.mxu0 %v708
    %v710 = vpop.f32.mrf.mxu0
    %v711 = vadd.f32 %v674, %v710
    %712 = vdwg.mxu0
    %v713 = vlaneseq
    %v714 = vand.u32 %v713, 127
    %vm715 = vcmp.ge.s32.totalorder %v714, 1
    %vm716 = vcmp.lt.s32.totalorder %v714, 4
    %vm717 = vmand %vm715, %vm716
    %v718 = vsel %vm717, %v711, -inf
    %vm719 = vcmask 60416
    %v720 = vsel %vm719, %v718, -inf
    %721 = vmax.xlane.f32.xlu0 %v720
    %v722 = vpop.xlane.xlu0 %721
    %v723 = vsub.f32 %v711, %v722
    %v724 = vsel %vm717, %v723, -inf
    %v725 = vmul.f32 %v724, 1.442695
    %v726 = vpow.pop %v725
    %v727 = vsel %vm719, %v726, 0.0
    %728 = vadd.xlane.f32.xlu0 %v727
    %v729 = vpop.xlane.xlu0 %728
    %v730 = vrcp.pop %v729
    %v731 = vmul.f32 %v729, %v730
    %v732 = vsub.f32 1.0, %v731
    %v733 = vmul.f32 %v730, %v732
    %v734 = vadd.f32 %v730, %v733
    %vm735 = vweird.f32 %v729
    %vm736 = vweird.f32 %v730
    %vm737 = vmor %vm735, %vm736
    %v738 = vsel %vm737, %v730, %v734
    %v739 = vand.u32 2147483647, %v729
    %vm740 = vcmp.eq.f32.partialorder %v739, 8.507059e+37
    %v741 = vand.u32 %v729, 2147483648
    %v742 = vor.u32 1.1754944e-38, %v741
    %v743 = vsel %vm740, %v742, %v738
    %v744 = vmul.f32 %v726, %v743
    %vm745 = vcmask 3072
    %746 = vst.msk [vmem:[%s5] sm:$0xf] %vm745, %v711
    %748 = vrot.lane.b32.xlu0 %v744, 127
    %v749 = vpop.permute.xlu0 %748
    %vm751 = vcmask 19456
    %752 = vst.msk [vmem:[#allocation2] sm:$0xf] %vm751, %v749
    // Predicated region
    $region22: #{tpu_custom_call.1} parent=1 // pred_check
      _
    $region23: #{tpu_custom_call.1} parent=1 // pred_check_branch
      %754 = sbr.rel (0) target = $region25
    $region24: #{tpu_custom_call.1} parent=1 // pred_region
      _
    $region25: #{tpu_custom_call.1} parent=1 // pred_fallthru
      _
    // Predicated region
    $region26: #{tpu_custom_call.1} parent=1 // pred_check
      _
    $region27: #{tpu_custom_call.1} parent=1 // pred_check_branch
      %756 = sbr.rel (0) target = $region29
    $region28: #{tpu_custom_call.1} parent=1 // pred_region
      %758 = vsyncadd [#allocation3], 0
      %s760 = sshll.u32 [#allocation2], 4
      %s761 = int_to_ptr.vmem [resolvable:$true] %s760
      %s762 = sshll.u32 %s6, 4
      %s763 = int_to_ptr.hbm [resolvable:$true] %s762
      %765 = dma.vmem_to_hbm [thread:$0]  %s761, 64, %s763, [#allocation3]
    $region29: #{tpu_custom_call.1} parent=1 // pred_fallthru
      _
    // Predicated region
    $region30: #{tpu_custom_call.1} parent=1 // pred_check
      _
    $region31: #{tpu_custom_call.1} parent=1 // pred_check_branch
      %767 = sbr.rel (0) target = $region33
    $region32: #{tpu_custom_call.1} parent=1 // pred_region
      _
    $region33: #{tpu_custom_call.1} parent=1 // pred_fallthru
      _
    // Predicated region
    $region34: #{tpu_custom_call.1} parent=1 // pred_check
      _
    $region35: #{tpu_custom_call.1} parent=1 // pred_check_branch
      %769 = sbr.rel (0) target = $region37
    $region36: #{tpu_custom_call.1} parent=1 // pred_region
      %771 = dma.done [#allocation3], 64
    $region37: #{tpu_custom_call.1} parent=1 // pred_fallthru
      _
    %772 = vsyncpa [#allocation3], 1

</llo_original>
